<compile_context>
chip_gen: v5e
topology: v5e:2x2
jax: 0.10.0
libtpu: 0.0.40
codegen_flags: <defaults>
</compile_context>

<pallas_src>
import functools

import jax
import jax.numpy as jnp
from jax.experimental import pallas as pl
from jax.experimental.pallas import tpu as pltpu


def _p_pad(pred_len):
    return max(128, ((pred_len + 127) // 128) * 128)


def _rnn_kernel(num_layers, T, N, F, H, x_ref, w_ref, out_ref):
    NL = num_layers
    P_pad = out_ref.shape[-1]

    # Single whole-buffer load; all unpacking below is static slicing of a value.
    w = w_ref[...]
    r = 0
    w_ih0 = w[r:r + F, 0:H]; r += F                          # (F, H)
    w_hh_bd = w[r:r + NL * H, 0:NL * H]; r += NL * H          # block-diag (NL*H, NL*H)
    w_ihr = []
    for _ in range(NL - 1):
        w_ihr.append(w[r:r + H, 0:H]); r += H                 # (H, H) per upper layer
    biases = []
    for _ in range(NL):
        biases.append(w[r:r + 1, 0:H]); r += 1                # (1, H) fused b_ih + b_hh
    w_lin = w[r:r + H, 0:P_pad]; r += H                       # (H, P_pad)
    b_lin = w[r:r + 1, 0:P_pad]; r += 1                       # (1, P_pad)

    # Hoisted layer-0 input projection (+ fused bias) for ALL time steps at once.
    pre0 = (jnp.dot(x_ref[...], w_ih0, preferred_element_type=jnp.float32)
            + biases[0])                                      # (T*N, H)

    h = [jnp.zeros((N, H), jnp.float32) for _ in range(NL)]
    h_outs = []
    for t in range(T):  # fully unrolled sequential recurrence (time axis = B)
        if t > 0:
            # One block-diagonal matmul yields every layer's recurrent term.
            # It depends only on t-1 state, so it overlaps the layer-0 tanh.
            h_cat = h[0] if NL == 1 else jnp.concatenate(h, axis=1)   # (N, NL*H)
            rec = jnp.dot(h_cat, w_hh_bd, preferred_element_type=jnp.float32)
        pre = pre0[t * N:(t + 1) * N, :]
        if t > 0:  # at t == 0 the hidden state is exactly zero -> skip recurrence
            pre = pre + rec[:, 0:H]
        h[0] = jnp.tanh(pre)
        for l in range(1, NL):
            pre_l = (jnp.dot(h[l - 1], w_ihr[l - 1],
                             preferred_element_type=jnp.float32) + biases[l])
            if t > 0:
                pre_l = pre_l + rec[:, l * H:(l + 1) * H]
            h[l] = jnp.tanh(pre_l)
        h_outs.append(h[NL - 1])

    # Register-resident last-layer hiddens -> one head matmul + lane-dense store.
    h_all = jnp.concatenate(h_outs, axis=0)                   # (T*N, H)
    out_ref[...] = (jnp.dot(h_all, w_lin, preferred_element_type=jnp.float32)
                    + b_lin).astype(out_ref.dtype)


def pack_params(params, *, seq_len, hidden, num_layers, pred_len):
    """One-time packing of all weights into a single padded f32 VMEM slab."""
    H, F, NL, P = hidden, seq_len, num_layers, pred_len
    P_pad = _p_pad(P)
    C = max(NL * H, P_pad, H)
    R = F + NL * H + (NL - 1) * H + NL + H + 1
    R_pad = ((R + 7) // 8) * 8
    buf = jnp.zeros((R_pad, C), jnp.float32)

    r = 0
    buf = buf.at[r:r + F, 0:H].set(params["w_ih_T"][0]); r += F
    for l in range(NL):  # block-diagonal recurrent weight
        buf = buf.at[r + l * H:r + (l + 1) * H,
                     l * H:(l + 1) * H].set(params["w_hh_T"][l])
    r += NL * H
    for l in range(1, NL):
        buf = buf.at[r:r + H, 0:H].set(params["w_ih_T"][l]); r += H
    for l in range(NL):  # fused bias b_ih + b_hh
        buf = buf.at[r:r + 1, 0:H].set(params["b_ih"][l] + params["b_hh"][l]); r += 1
    buf = buf.at[r:r + H, 0:P].set(params["w_lin_T"]); r += H
    buf = buf.at[r:r + 1, 0:P].set(params["b_lin"]); r += 1
    return buf


def rnn_model_forward(x, w_packed, *, num_layers, hidden, pred_len):
    """x: (B, L, D) float32. Returns (B, pred_len, D) — matches PyTorch Model.forward."""
    B, L, D = x.shape
    H, P, NL = hidden, pred_len, num_layers
    T, N, F = B, D, L          # time = B, rnn-batch = D, features = L
    P_pad = _p_pad(P)

    # x.view(B, D, -1) then flatten (time, batch): pure row-major reinterpretation.
    x_flat = jnp.reshape(x, (T * N, F)).astype(jnp.float32)

    kernel = functools.partial(_rnn_kernel, NL, T, N, F, H)
    vmem = pl.BlockSpec(memory_space=pltpu.MemorySpace.VMEM)

    out = pl.pallas_call(
        kernel,
        out_shape=jax.ShapeDtypeStruct((T * N, P_pad), jnp.float32),
        in_specs=[vmem, vmem],
        out_specs=vmem,
    )(x_flat, w_packed)

    # Drop the lane padding, then predictions.view(B, -1, D) (raw reinterpretation).
    return jnp.reshape(out[:, :P], (B, P, D))


def init_params(key, *, seq_len, hidden, num_layers, pred_len):
    """Deterministic synthetic weights (PyTorch-style uniform(-1/sqrt(H), 1/sqrt(H)))."""
    H, L, NL, P = hidden, seq_len, num_layers, pred_len
    k = 1.0 / jnp.sqrt(jnp.float32(H))
    keys = jax.random.split(key, 4 * NL + 2)
    w_ih_T, w_hh_T, b_ih, b_hh = [], [], [], []
    for l in range(NL):
        in_l = L if l == 0 else H
        w_ih_T.append(jax.random.uniform(keys[4 * l + 0], (in_l, H), jnp.float32, -k, k))
        w_hh_T.append(jax.random.uniform(keys[4 * l + 1], (H, H), jnp.float32, -k, k))
        b_ih.append(jax.random.uniform(keys[4 * l + 2], (1, H), jnp.float32, -k, k))
        b_hh.append(jax.random.uniform(keys[4 * l + 3], (1, H), jnp.float32, -k, k))
    w_lin_T = jax.random.uniform(keys[-2], (H, P), jnp.float32, -k, k)
    b_lin = jax.random.uniform(keys[-1], (1, P), jnp.float32, -k, k)
    return dict(w_ih_T=w_ih_T, w_hh_T=w_hh_T, b_ih=b_ih, b_hh=b_hh,
                w_lin_T=w_lin_T, b_lin=b_lin)


def reference_forward(x, params, *, num_layers, hidden, pred_len):
    """Pure-JAX reference mirroring torch nn.RNN + Linear on x.view(B, D, L)."""
    B, L, D = x.shape
    xr = jnp.reshape(x, (B, D, L))
    h = [jnp.zeros((D, hidden), jnp.float32) for _ in range(num_layers)]
    outs = []
    for t in range(B):
        inp = xr[t]
        for l in range(num_layers):
            h[l] = jnp.tanh(inp @ params["w_ih_T"][l] + params["b_ih"][l]
                            + h[l] @ params["w_hh_T"][l] + params["b_hh"][l])
            inp = h[l]
        outs.append(inp @ params["w_lin_T"] + params["b_lin"])
    rnn_pred = jnp.stack(outs)                     # (B, D, P)
    return jnp.reshape(rnn_pred, (B, pred_len, D))


if __name__ == "__main__":
    # args: seq_len=16, enc_in=4, hidden_layer_size=32, num_layers=2, pred_len=8
    B, L, D = 2, 16, 4
    H, NL, P = 32, 2, 8

    key = jax.random.PRNGKey(0)
    kx, kp = jax.random.split(key)
    x = jax.random.normal(kx, (B, L, D), jnp.float32)
    # x_mark, dec_inp, y_mark are unused by the PyTorch forward; omitted.
    params = init_params(kp, seq_len=L, hidden=H, num_layers=NL, pred_len=P)

    # One-time parameter packing (out of the per-call path).
    w_packed = jax.block_until_ready(
        pack_params(params, seq_len=L, hidden=H, num_layers=NL, pred_len=P))

    fwd = jax.jit(functools.partial(rnn_model_forward,
                                    num_layers=NL, hidden=H, pred_len=P))
    out = jax.block_until_ready(fwd(x, w_packed))

    ref = reference_forward(x, params, num_layers=NL, hidden=H, pred_len=P)
    assert out.shape == (B, P, D), out.shape
    assert jnp.allclose(out, ref, atol=1e-5, rtol=1e-5), float(jnp.max(jnp.abs(out - ref)))

    print("KERNEL_OK")
</pallas_src>

<mosaic_0001>
module attributes {stable_mosaic.version = 11 : i64} {
  func.func @_rnn_kernel(%arg0: memref<8x16xf32, #tpu.memory_space<vmem>>, %arg1: memref<152x128xf32, #tpu.memory_space<vmem>>, %arg2: memref<8x128xf32, #tpu.memory_space<vmem>>) attributes {dimension_semantics = [], scalar_prefetch = 0 : i64, scratch_operands = 0 : i64, tpu.core_type = #tpu.core_type<tc>} {
    %c0 = arith.constant 0 : index
    %c0_0 = arith.constant 0 : index
    %0 = vector.load %arg1[%c0, %c0_0] : memref<152x128xf32, #tpu.memory_space<vmem>>, vector<152x128xf32>
    %1 = vector.extract_strided_slice %0 {offsets = [0, 0], sizes = [16, 32], strides = [1, 1]} : vector<152x128xf32> to vector<16x32xf32>
    %2 = vector.extract_strided_slice %0 {offsets = [16, 0], sizes = [64, 64], strides = [1, 1]} : vector<152x128xf32> to vector<64x64xf32>
    %3 = vector.extract_strided_slice %0 {offsets = [80, 0], sizes = [32, 32], strides = [1, 1]} : vector<152x128xf32> to vector<32x32xf32>
    %4 = vector.extract_strided_slice %0 {offsets = [112, 0], sizes = [1, 32], strides = [1, 1]} : vector<152x128xf32> to vector<1x32xf32>
    %5 = vector.extract_strided_slice %0 {offsets = [113, 0], sizes = [1, 32], strides = [1, 1]} : vector<152x128xf32> to vector<1x32xf32>
    %6 = vector.extract_strided_slice %0 {offsets = [114, 0], sizes = [32, 128], strides = [1, 1]} : vector<152x128xf32> to vector<32x128xf32>
    %7 = vector.extract_strided_slice %0 {offsets = [146, 0], sizes = [1, 128], strides = [1, 1]} : vector<152x128xf32> to vector<1x128xf32>
    %c0_1 = arith.constant 0 : index
    %c0_2 = arith.constant 0 : index
    %8 = vector.load %arg0[%c0_1, %c0_2] : memref<8x16xf32, #tpu.memory_space<vmem>>, vector<8x16xf32>
    %cst = arith.constant dense<0.000000e+00> : vector<8x32xf32>
    %9 = tpu.matmul %8, %1, %cst {dimension_numbers = #tpu.dot_dimension_numbers<[1], [0], [0], [1], [0, 0, 1, 1], [], []>} : vector<8x16xf32>, vector<16x32xf32>, vector<8x32xf32> -> vector<8x32xf32>
    %10 = vector.broadcast %4 : vector<1x32xf32> to vector<8x32xf32>
    %11 = arith.addf %9, %10 : vector<8x32xf32>
    %12 = vector.extract_strided_slice %11 {offsets = [0, 0], sizes = [4, 32], strides = [1, 1]} : vector<8x32xf32> to vector<4x32xf32>
    %13 = math.tanh %12 : vector<4x32xf32>
    %cst_3 = arith.constant dense<0.000000e+00> : vector<4x32xf32>
    %14 = tpu.matmul %13, %3, %cst_3 {dimension_numbers = #tpu.dot_dimension_numbers<[1], [0], [0], [1], [0, 0, 1, 1], [], []>} : vector<4x32xf32>, vector<32x32xf32>, vector<4x32xf32> -> vector<4x32xf32>
    %15 = vector.broadcast %5 : vector<1x32xf32> to vector<4x32xf32>
    %16 = arith.addf %14, %15 : vector<4x32xf32>
    %17 = math.tanh %16 : vector<4x32xf32>
    %18 = tpu.concatenate %13, %17 in 1 : vector<4x32xf32>, vector<4x32xf32> -> vector<4x64xf32>
    %cst_4 = arith.constant dense<0.000000e+00> : vector<4x64xf32>
    %19 = tpu.matmul %18, %2, %cst_4 {dimension_numbers = #tpu.dot_dimension_numbers<[1], [0], [0], [1], [0, 0, 1, 1], [], []>} : vector<4x64xf32>, vector<64x64xf32>, vector<4x64xf32> -> vector<4x64xf32>
    %20 = vector.extract_strided_slice %11 {offsets = [4, 0], sizes = [4, 32], strides = [1, 1]} : vector<8x32xf32> to vector<4x32xf32>
    %21 = vector.extract_strided_slice %19 {offsets = [0, 0], sizes = [4, 32], strides = [1, 1]} : vector<4x64xf32> to vector<4x32xf32>
    %22 = arith.addf %20, %21 : vector<4x32xf32>
    %23 = math.tanh %22 : vector<4x32xf32>
    %cst_5 = arith.constant dense<0.000000e+00> : vector<4x32xf32>
    %24 = tpu.matmul %23, %3, %cst_5 {dimension_numbers = #tpu.dot_dimension_numbers<[1], [0], [0], [1], [0, 0, 1, 1], [], []>} : vector<4x32xf32>, vector<32x32xf32>, vector<4x32xf32> -> vector<4x32xf32>
    %25 = vector.broadcast %5 : vector<1x32xf32> to vector<4x32xf32>
    %26 = arith.addf %24, %25 : vector<4x32xf32>
    %27 = vector.extract_strided_slice %19 {offsets = [0, 32], sizes = [4, 32], strides = [1, 1]} : vector<4x64xf32> to vector<4x32xf32>
    %28 = arith.addf %26, %27 : vector<4x32xf32>
    %29 = math.tanh %28 : vector<4x32xf32>
    %30 = tpu.concatenate %17, %29 in 0 : vector<4x32xf32>, vector<4x32xf32> -> vector<8x32xf32>
    %cst_6 = arith.constant dense<0.000000e+00> : vector<8x128xf32>
    %31 = tpu.matmul %30, %6, %cst_6 {dimension_numbers = #tpu.dot_dimension_numbers<[1], [0], [0], [1], [0, 0, 1, 1], [], []>} : vector<8x32xf32>, vector<32x128xf32>, vector<8x128xf32> -> vector<8x128xf32>
    %32 = vector.broadcast %7 : vector<1x128xf32> to vector<8x128xf32>
    %33 = arith.addf %31, %32 : vector<8x128xf32>
    %c0_7 = arith.constant 0 : index
    %c0_8 = arith.constant 0 : index
    %34 = vector.load %arg2[%c0_7, %c0_8] : memref<8x128xf32, #tpu.memory_space<vmem>>, vector<8x128xf32>
    tpu.vector_store %arg2[%c0_7, %c0_8], %33 {strides = array<i32>} : memref<8x128xf32, #tpu.memory_space<vmem>>, vector<8x128xf32>,
    return
  }
}

</mosaic_0001>

<llo_original>
// kernel: rnn_model_forward.1
$region0: #{rnn_model_forward.1}
  #allocation0 [shape = 'u32[]', space=smem, size = 0x4, offset = 0x4, fixed_abs, tag = 'smem constant byte address 0x4 - core index']
  #allocation1 [shape = 'u32[72,128]{1,0:T(1,128)}', space=vmem, size = 0x9000, scoped, tag = 'internal scratch']
  %s0 = inlined_call_operand.vmem [shape: f32[8,16], index: 0, kind: input, shape index: {}]
  %s1 = inlined_call_operand.hbm [shape: f32[152,128], index: 1, kind: input, shape index: {}]
  %s2 = inlined_call_operand.vmem [shape: f32[8,128], index: 2, kind: output, shape index: {}]
  %s3 = sld [smem:[#allocation0]]
  $region22: #{rnn_model_forward.1} parent=0
    _
  %s5 = ssub.s32 1, %s3
  %s6 = scalar_select 0, %s5, %s3
  $region1: #{rnn_model_forward.1} parent=0
    #allocation2 [shape = 'u8[77824]{0}', space=vmem, size = 0x13000, scoped, tag = 'input window, operand 1, single buffered']
    #allocation3 [shape = 's32[1]{0}', space=sflag, size = 0x4, scoped, tag = 'scoped memory for rnn_model_forward.1']
    %7 = vsyncpa [#allocation3], 0
    // Predicated region
    $region2: #{rnn_model_forward.1} parent=1 // pred_check
      _
    $region3: #{rnn_model_forward.1} parent=1 // pred_check_branch
      %9 = sbr.rel (0) target = $region5
    $region4: #{rnn_model_forward.1} parent=1 // pred_region
      _
    $region5: #{rnn_model_forward.1} parent=1 // pred_fallthru
      _
    // Predicated region
    $region6: #{rnn_model_forward.1} parent=1 // pred_check
      _
    $region7: #{rnn_model_forward.1} parent=1 // pred_check_branch
      %11 = sbr.rel (0) target = $region9
    $region8: #{rnn_model_forward.1} parent=1 // pred_region
      %13 = vsyncadd [#allocation3], 0
      %s14 = sshll.u32 %s1, 4
      %s15 = int_to_ptr.hbm [resolvable:$true] %s14
      %s16 = sshll.u32 [#allocation2], 4
      %s17 = int_to_ptr.vmem [resolvable:$true] %s16
      %22 = dma.hbm_to_vmem [thread:$0]  %s15, 2432, %s17, [#allocation3], 128, 128, 8
    $region9: #{rnn_model_forward.1} parent=1 // pred_fallthru
      _
    // Predicated region
    $region10: #{rnn_model_forward.1} parent=1 // pred_check
      _
    $region11: #{rnn_model_forward.1} parent=1 // pred_check_branch
      %24 = sbr.rel (0) target = $region13
    $region12: #{rnn_model_forward.1} parent=1 // pred_region
      %26 = dma.done [#allocation3], 2432
    $region13: #{rnn_model_forward.1} parent=1 // pred_fallthru
      _
    %v27 = vld [vmem:[#allocation2] sm:$0xff]
    %v28 = vld [vmem:[#allocation2 + $0x8] sm:$0xff]
    %v29 = vld [vmem:[#allocation2 + $0x10] sm:$0xff]
    %v30 = vld [vmem:[#allocation2 + $0x18] sm:$0xff]
    %v31 = vld [vmem:[#allocation2 + $0x20] sm:$0xff]
    %v32 = vld [vmem:[#allocation2 + $0x28] sm:$0xff]
    %v33 = vld [vmem:[#allocation2 + $0x30] sm:$0xff]
    %v34 = vld [vmem:[#allocation2 + $0x38] sm:$0xff]
    %v35 = vld [vmem:[#allocation2 + $0x40] sm:$0xff]
    %v36 = vld [vmem:[#allocation2 + $0x48] sm:$0xff]
    %v37 = vld [vmem:[#allocation2 + $0x50] sm:$0xff]
    %v38 = vld [vmem:[#allocation2 + $0x58] sm:$0xff]
    %v39 = vld [vmem:[#allocation2 + $0x60] sm:$0xff]
    %v40 = vld [vmem:[#allocation2 + $0x68] sm:$0xff]
    %v41 = vld [vmem:[#allocation2 + $0x70] sm:$0xff]
    %v42 = vld [vmem:[#allocation2 + $0x78] sm:$0xff]
    %v43 = vld [vmem:[#allocation2 + $0x80] sm:$0xff]
    %v44 = vld [vmem:[#allocation2 + $0x88] sm:$0xff]
    %v45 = vld [vmem:[#allocation2 + $0x90] sm:$0xff]
    %v46 = vld [vmem:[%s0] sm:$0xff]
    %v47 = vperm.slane %v41, 0
    %vm48 = vcmask 130048
    %v50 = vsel %vm48, %v46, 0
    %52 = vmatpush.msra.mxu0 0.0
    %53 = vmatpush.msra.mxu0 0.0
    %54 = vmatpush.msra.mxu0 0.0
    %55 = vmatpush.msra.mxu0 0.0
    %56 = vmatpush.msra.mxu0 0.0
    %57 = vmatpush.msra.mxu0 0.0
    %58 = vmatpush.msra.mxu0 0.0
    %59 = vmatpush.msra.mxu0 0.0
    %60 = vmatpush.msra.mxu0 0.0
    %61 = vmatpush.msra.mxu0 0.0
    %62 = vmatpush.msra.mxu0 0.0
    %63 = vmatpush.msra.mxu0 0.0
    %64 = vmatpush.msra.mxu0 0.0
    %65 = vmatpush.msra.mxu0 0.0
    %66 = vmatpush.msra.mxu0 %v28
    %67 = vmatpush.msra.mxu0 %v27
    %68 = vmatmul.f32.gmra.mxu0 %v50
    %v69 = vpop.f32.mrf.mxu0
    %v70 = vadd.f32 %v47, %v69
    %71 = vdwg.mxu0
    %v72 = vtanh.pop %v70
    %v73 = vperm.slane %v41, 1
    %vm74 = vcmask 261120
    %v76 = vsel %vm74, %v72, 0
    %78 = vmatpush.msra.mxu0 0.0
    %79 = vmatpush.msra.mxu0 0.0
    %80 = vmatpush.msra.mxu0 0.0
    %81 = vmatpush.msra.mxu0 0.0
    %82 = vmatpush.msra.mxu0 0.0
    %83 = vmatpush.msra.mxu0 0.0
    %84 = vmatpush.msra.mxu0 0.0
    %85 = vmatpush.msra.mxu0 0.0
    %86 = vmatpush.msra.mxu0 0.0
    %87 = vmatpush.msra.mxu0 0.0
    %88 = vmatpush.msra.mxu0 0.0
    %89 = vmatpush.msra.mxu0 0.0
    %90 = vmatpush.msra.mxu0 %v40
    %91 = vmatpush.msra.mxu0 %v39
    %92 = vmatpush.msra.mxu0 %v38
    %93 = vmatpush.msra.mxu0 %v37
    %94 = vmatmul.f32.gmra.mxu0 %v76
    %v95 = vpop.f32.mrf.mxu0
    %v96 = vadd.f32 %v73, %v95
    %97 = vdwg.mxu0
    %v98 = vtanh.pop %v96
    %100 = vrot.lane.b32.xlu0 %v98, 32
    %v101 = vpop.permute.xlu0 %100
    %v103 = vsel %vm74, %v72, %v101
    %vm104 = vcmask 523264
    %v106 = vsel %vm104, %v103, 0
    %108 = vmatpush.msra.mxu0 0.0
    %109 = vmatpush.msra.mxu0 0.0
    %110 = vmatpush.msra.mxu0 0.0
    %111 = vmatpush.msra.mxu0 0.0
    %112 = vmatpush.msra.mxu0 0.0
    %113 = vmatpush.msra.mxu0 0.0
    %114 = vmatpush.msra.mxu0 0.0
    %115 = vmatpush.msra.mxu0 0.0
    %116 = vmatpush.msra.mxu0 %v36
    %117 = vmatpush.msra.mxu0 %v35
    %118 = vmatpush.msra.mxu0 %v34
    %119 = vmatpush.msra.mxu0 %v33
    %120 = vmatpush.msra.mxu0 %v32
    %121 = vmatpush.msra.mxu0 %v31
    %122 = vmatpush.msra.mxu0 %v30
    %123 = vmatpush.msra.mxu0 %v29
    %124 = vmatmul.f32.gmra.mxu0 %v106
    %v125 = vpop.f32.mrf.mxu0
    %v126 = vadd.f32 0.0, %v125
    %127 = vdwg.mxu0
    %v129 = vrot.slane %v126, 4
    %v131 = vadd.f32 %v70, %v129
    %v132 = vtanh.pop %v131
    %v134 = vrot.slane %v132, 4
    %v135 = vsel %vm74, %v134, 0
    %137 = vmatpush.msra.mxu0 0.0
    %138 = vmatpush.msra.mxu0 0.0
    %139 = vmatpush.msra.mxu0 0.0
    %140 = vmatpush.msra.mxu0 0.0
    %141 = vmatpush.msra.mxu0 0.0
    %142 = vmatpush.msra.mxu0 0.0
    %143 = vmatpush.msra.mxu0 0.0
    %144 = vmatpush.msra.mxu0 0.0
    %145 = vmatpush.msra.mxu0 0.0
    %146 = vmatpush.msra.mxu0 0.0
    %147 = vmatpush.msra.mxu0 0.0
    %148 = vmatpush.msra.mxu0 0.0
    %149 = vmatpush.msra.mxu0 %v40
    %150 = vmatpush.msra.mxu0 %v39
    %151 = vmatpush.msra.mxu0 %v38
    %152 = vmatpush.msra.mxu0 %v37
    %153 = vmatmul.f32.gmra.mxu0 %v135
    %v154 = vpop.f32.mrf.mxu0
    %v155 = vadd.f32 %v73, %v154
    %156 = vdwg.mxu0
    %157 = vrot.lane.b32.xlu0 %v126, 96
    %v158 = vpop.permute.xlu0 %157
    %v160 = vadd.f32 %v155, %v158
    %v161 = vtanh.pop %v160
    %v163 = vrot.slane %v161, 4
    %vm165 = vcmask 1043456
    %v166 = vsel %vm165, %v98, %v163
    %v167 = vperm.slane %v45, 2
    %vm173 = vcmask 1045504
    %v174 = vrot.slane %v41, 2
    %v175 = vrot.slane %v42, 2
    %v176 = vsel %vm173, %v174, %v175
    %v177 = vrot.slane %v43, 2
    %v178 = vsel %vm173, %v175, %v177
    %v179 = vrot.slane %v44, 2
    %v180 = vsel %vm173, %v177, %v179
    %v181 = vrot.slane %v45, 2
    %v182 = vsel %vm173, %v179, %v181
    %v188 = vsel %vm74, %v166, 0
    %190 = vmatpush.msra.mxu0 0.0
    %191 = vmatpush.msra.mxu0 0.0
    %192 = vmatpush.msra.mxu0 0.0
    %193 = vmatpush.msra.mxu0 0.0
    %194 = vmatpush.msra.mxu0 0.0
    %195 = vmatpush.msra.mxu0 0.0
    %196 = vmatpush.msra.mxu0 0.0
    %197 = vmatpush.msra.mxu0 0.0
    %198 = vmatpush.msra.mxu0 0.0
    %199 = vmatpush.msra.mxu0 0.0
    %200 = vmatpush.msra.mxu0 0.0
    %201 = vmatpush.msra.mxu0 0.0
    %202 = vmatpush.msra.mxu0 %v182
    %203 = vmatpush.msra.mxu0 %v180
    %204 = vmatpush.msra.mxu0 %v178
    %205 = vmatpush.msra.mxu0 %v176
    %206 = vmatmul.f32.gmra.mxu0 %v188
    %v207 = vpop.f32.mrf.mxu0
    %v208 = vadd.f32 %v167, %v207
    %209 = vdwg.mxu0
    %210 = vst [vmem:[%s2] sm:$0xff] %v208
    // Predicated region
    $region14: #{rnn_model_forward.1} parent=1 // pred_check
      _
    $region15: #{rnn_model_forward.1} parent=1 // pred_check_branch
      %212 = sbr.rel (0) target = $region17
    $region16: #{rnn_model_forward.1} parent=1 // pred_region
      _
    $region17: #{rnn_model_forward.1} parent=1 // pred_fallthru
      _
    // Predicated region
    $region18: #{rnn_model_forward.1} parent=1 // pred_check
      _
    $region19: #{rnn_model_forward.1} parent=1 // pred_check_branch
      %214 = sbr.rel (0) target = $region21
    $region20: #{rnn_model_forward.1} parent=1 // pred_region
      _
    $region21: #{rnn_model_forward.1} parent=1 // pred_fallthru
      _
    %215 = vsyncpa [#allocation3], 1

</llo_original>
